<compile_context>
chip_gen: v6e
topology: v6e:2x2x1
jax: 0.10.0
libtpu: 0.0.40
codegen_flags: <defaults>
</compile_context>

<pallas_src>
import jax
import jax.numpy as jnp
from jax.experimental import pallas as pl
from jax.experimental.pallas import tpu as pltpu


def _round_up(x, m):
    return ((x + m - 1) // m) * m


def _trans_reg_kernel(rs_ref, ts_ref, tr_ref, rr_ref,
                      w1a_ref, w1b_ref, w1cb_ref, w1ac_ref,
                      w2_ref, w3_ref, w4_ref, out_ref):
    """One row-tile: out = MLP(bottom_rows) - MLP(up_rows), shared weights."""
    f32 = jnp.float32
    cdt = rs_ref.dtype          # compute dtype for MXU inputs (f32 or bf16)
    tm = out_ref.shape[0]
    n1 = w1a_ref.shape[1]       # 32

    # Layer 1 with the concat folded into W1 slices:
    #   up@W1     = rs@W1a + ts@W1b + tr@W1c
    #   bottom@W1 = rr@(W1a+W1c) + tr@W1b
    # tr's two matmuls are fused into one 64-wide matmul via w1cb = [W1c | W1b].
    tr_cb = jnp.dot(tr_ref[...], w1cb_ref[...], preferred_element_type=f32)   # (tm, 64)
    h_up = (jnp.dot(rs_ref[...], w1a_ref[...], preferred_element_type=f32)
            + jnp.dot(ts_ref[...], w1b_ref[...], preferred_element_type=f32)
            + tr_cb[:, :n1])
    h_bot = (jnp.dot(rr_ref[...], w1ac_ref[...], preferred_element_type=f32)
             + tr_cb[:, n1:])

    # Stack both branches (bottom first, then up) and run layers 2-4 once.
    h = jnp.concatenate(
        [jnp.maximum(h_bot, 0.0), jnp.maximum(h_up, 0.0)], axis=0
    ).astype(cdt)                                                   # (2*tm, 32)

    h = jnp.maximum(jnp.dot(h, w2_ref[...], preferred_element_type=f32), 0.0).astype(cdt)
    h = jnp.maximum(jnp.dot(h, w3_ref[...], preferred_element_type=f32), 0.0).astype(cdt)
    h = jnp.maximum(jnp.dot(h, w4_ref[...], preferred_element_type=f32), 0.0)  # (2*tm, 8)

    # cy - cx ; padded output columns (>=3) are zeros of both branches.
    out_ref[...] = (h[:tm, :] - h[tm:, :]).astype(out_ref.dtype)


def trans_reg_branch(r_source, r_reference, t_source, t_reference, weights,
                     *, tm=None):
    """JAX wrapper reproducing TransRegBranch.forward.

    Args:
      r_source, r_reference, t_source, t_reference: (B, N, 256), f32 or bf16
        (compute dtype follows the input dtype; no extra HBM cast pass here).
      weights: tuple (W1, W2, W3, W4) stored (in_features, out_features):
               (768,32), (32,64), (64,128), (128,3).
      tm: row tile (rows of B*N per grid step). Default: 2048 for bf16 inputs,
          1024 for f32 — both fit the default scoped VMEM on v5e/v6e/v7x.
    Returns:
      t_vec: (B, N, 3) float32.
    """
    w1, w2, w3, w4 = weights
    B, N, F = r_source.shape
    assert w1.shape[0] == 3 * F, (w1.shape, F)
    out_dim = w4.shape[1]

    compute_dtype = r_source.dtype
    if tm is None:
        tm = 2048 if compute_dtype == jnp.bfloat16 else 1024

    # Split W1 into per-input slices; fold both weight reuses into single matmuls.
    w1a, w1b, w1c = w1[:F], w1[F:2 * F], w1[2 * F:]
    w1ac = w1a + w1c                                   # bottom: rr @ (W1a + W1c)
    w1cb = jnp.concatenate([w1c, w1b], axis=1)         # tr @ [W1c | W1b]  (256, 64)

    # Output padded to 8 lanes only (equals full array last dim -> legal block).
    out_pad = max(8, _round_up(out_dim, 8))
    w4p = jnp.zeros((w4.shape[0], out_pad), w4.dtype).at[:, :out_dim].set(w4)

    # Row tiling: multiple of 8; capped at ceil(M/2) so both v7x TCs get work.
    M = B * N
    tm_eff = min(tm, _round_up(max((M + 1) // 2, 1), 8))
    tm_eff = max(8, _round_up(tm_eff, 8))
    n_tiles = pl.cdiv(M, tm_eff)

    # No padding, no casting of the big inputs — stream them as-is.
    rs2d = r_source.reshape(M, F)
    ts2d = t_source.reshape(M, F)
    tr2d = t_reference.reshape(M, F)
    rr2d = r_reference.reshape(M, F)

    wcast = lambda w: w.astype(compute_dtype)
    row_spec = pl.BlockSpec((tm_eff, F), lambda i: (i, 0))
    w_spec = lambda w: pl.BlockSpec(w.shape, lambda i: (0, 0))

    out2d = pl.pallas_call(
        _trans_reg_kernel,
        out_shape=jax.ShapeDtypeStruct((M, out_pad), jnp.float32),
        grid=(n_tiles,),
        in_specs=[
            row_spec, row_spec, row_spec, row_spec,                 # r_s, t_s, t_r, r_r rows
            w_spec(w1a), w_spec(w1b), w_spec(w1cb), w_spec(w1ac),   # layer-1 slices
            w_spec(w2), w_spec(w3), w_spec(w4p),                    # layers 2-4 (W4 padded)
        ],
        out_specs=pl.BlockSpec((tm_eff, out_pad), lambda i: (i, 0)),
        compiler_params=pltpu.CompilerParams(
            dimension_semantics=("parallel",)),
    )(rs2d, ts2d, tr2d, rr2d,
      wcast(w1a), wcast(w1b), wcast(w1cb), wcast(w1ac),
      wcast(w2), wcast(w3), wcast(w4p))

    return out2d[:, :out_dim].reshape(B, N, out_dim)


def init_weights(key):
    """Deterministic bias-free Linear weights, stored as (in_features, out_features)."""
    dims = [(256 * 3, 32), (32, 64), (64, 128), (128, 3)]
    keys = jax.random.split(key, len(dims))
    ws = []
    for k, (fin, fout) in zip(keys, dims):
        bound = 1.0 / jnp.sqrt(fin)
        ws.append(jax.random.uniform(k, (fin, fout), jnp.float32, -bound, bound))
    return tuple(ws)


def _reference_forward(r_s, r_r, t_s, t_r, weights):
    """Pure-JAX reference identical to the torch forward (for sanity check)."""
    w1, w2, w3, w4 = weights

    def mlp(x):
        h = jax.nn.relu(x @ w1)
        h = jax.nn.relu(h @ w2)
        h = jax.nn.relu(h @ w3)
        h = jax.nn.relu(h @ w4)
        return h

    up = jnp.concatenate([r_s, t_s, t_r], axis=2)
    bottom = jnp.concatenate([r_r, t_r, r_r], axis=2)
    return mlp(bottom) - mlp(up)


if __name__ == "__main__":
    key = jax.random.PRNGKey(0)
    k_w, k1, k2, k3, k4 = jax.random.split(key, 5)

    weights = init_weights(k_w)
    F = 256

    # Case 1: small shapes (batch=2, seq=8), f32 path.
    B, N = 2, 8
    r_source = jax.random.normal(k1, (B, N, F), jnp.float32)
    r_reference = jax.random.normal(k2, (B, N, F), jnp.float32)
    t_source = jax.random.normal(k3, (B, N, F), jnp.float32)
    t_reference = jax.random.normal(k4, (B, N, F), jnp.float32)

    out = trans_reg_branch(r_source, r_reference, t_source, t_reference, weights)
    out = jax.block_until_ready(out)
    ref = _reference_forward(r_source, r_reference, t_source, t_reference, weights)
    assert out.shape == (B, N, 3), out.shape
    assert jnp.allclose(out, ref, atol=1e-4, rtol=1e-4), "mismatch vs reference (case 1)"

    # Case 2: ragged row count (exercises the non-divisible last grid block,
    # i.e. masked stores for the partial output tile — no wrapper-side padding).
    B2, N2 = 2, 13
    r_s2 = jax.random.normal(k1, (B2, N2, F), jnp.float32)
    r_r2 = jax.random.normal(k2, (B2, N2, F), jnp.float32)
    t_s2 = jax.random.normal(k3, (B2, N2, F), jnp.float32)
    t_r2 = jax.random.normal(k4, (B2, N2, F), jnp.float32)
    out2 = jax.block_until_ready(
        trans_reg_branch(r_s2, r_r2, t_s2, t_r2, weights))
    ref2 = _reference_forward(r_s2, r_r2, t_s2, t_r2, weights)
    assert out2.shape == (B2, N2, 3), out2.shape
    assert jnp.allclose(out2, ref2, atol=1e-4, rtol=1e-4), "mismatch vs reference (case 2)"

    # Case 3: bf16 producer path (inputs already bf16; no wrapper astype).
    to_bf16 = lambda x: x.astype(jnp.bfloat16)
    out3 = jax.block_until_ready(
        trans_reg_branch(to_bf16(r_source), to_bf16(r_reference),
                         to_bf16(t_source), to_bf16(t_reference), weights))
    # Reference on the same bf16-rounded inputs (f32 math) -> only weight/cast error remains.
    back = lambda x: to_bf16(x).astype(jnp.float32)
    ref3 = _reference_forward(back(r_source), back(r_reference),
                              back(t_source), back(t_reference), weights)
    assert out3.shape == (B, N, 3), out3.shape
    assert out3.dtype == jnp.float32, out3.dtype
    assert jnp.allclose(out3, ref3, atol=5e-2, rtol=5e-2), "mismatch vs reference (case 3, bf16)"

    print("KERNEL_OK")
</pallas_src>

<mosaic_0001>
module attributes {stable_mosaic.version = 11 : i64} {
  func.func @_trans_reg_kernel(%arg0: i32, %arg1: memref<8x256xf32, #tpu.memory_space<vmem>>, %arg2: memref<8x256xf32, #tpu.memory_space<vmem>>, %arg3: memref<8x256xf32, #tpu.memory_space<vmem>>, %arg4: memref<8x256xf32, #tpu.memory_space<vmem>>, %arg5: memref<256x32xf32, #tpu.memory_space<vmem>>, %arg6: memref<256x32xf32, #tpu.memory_space<vmem>>, %arg7: memref<256x64xf32, #tpu.memory_space<vmem>>, %arg8: memref<256x32xf32, #tpu.memory_space<vmem>>, %arg9: memref<32x64xf32, #tpu.memory_space<vmem>>, %arg10: memref<64x128xf32, #tpu.memory_space<vmem>>, %arg11: memref<128x8xf32, #tpu.memory_space<vmem>>, %arg12: memref<8x8xf32, #tpu.memory_space<vmem>>) attributes {dimension_semantics = [#tpu.dimension_semantics<parallel>], iteration_bounds = array<i64: 2>, scalar_prefetch = 0 : i64, scratch_operands = 0 : i64, tpu.core_type = #tpu.core_type<tc>, window_params = [{transform_indices = @transform_0, window_bounds = array<i64: 8, 256>}, {transform_indices = @transform_1, window_bounds = array<i64: 8, 256>}, {transform_indices = @transform_2, window_bounds = array<i64: 8, 256>}, {transform_indices = @transform_3, window_bounds = array<i64: 8, 256>}, {pipeline_mode = #tpu.pipeline_mode<synchronous>, transform_indices = @transform_4, window_bounds = array<i64: 256, 32>}, {pipeline_mode = #tpu.pipeline_mode<synchronous>, transform_indices = @transform_5, window_bounds = array<i64: 256, 32>}, {pipeline_mode = #tpu.pipeline_mode<synchronous>, transform_indices = @transform_6, window_bounds = array<i64: 256, 64>}, {pipeline_mode = #tpu.pipeline_mode<synchronous>, transform_indices = @transform_7, window_bounds = array<i64: 256, 32>}, {pipeline_mode = #tpu.pipeline_mode<synchronous>, transform_indices = @transform_8, window_bounds = array<i64: 32, 64>}, {pipeline_mode = #tpu.pipeline_mode<synchronous>, transform_indices = @transform_9, window_bounds = array<i64: 64, 128>}, {pipeline_mode = #tpu.pipeline_mode<synchronous>, transform_indices = @transform_10, window_bounds = array<i64: 128, 8>}, {transform_indices = @transform_11, window_bounds = array<i64: 8, 8>}]} {
    %c0 = arith.constant 0 : index
    %c0_0 = arith.constant 0 : index
    %0 = vector.load %arg3[%c0, %c0_0] : memref<8x256xf32, #tpu.memory_space<vmem>>, vector<8x256xf32>
    %c0_1 = arith.constant 0 : index
    %c0_2 = arith.constant 0 : index
    %1 = vector.load %arg7[%c0_1, %c0_2] : memref<256x64xf32, #tpu.memory_space<vmem>>, vector<256x64xf32>
    %cst = arith.constant dense<0.000000e+00> : vector<8x64xf32>
    %2 = tpu.matmul %0, %1, %cst {dimension_numbers = #tpu.dot_dimension_numbers<[1], [0], [0], [1], [0, 0, 1, 1], [], []>} : vector<8x256xf32>, vector<256x64xf32>, vector<8x64xf32> -> vector<8x64xf32>
    %c0_3 = arith.constant 0 : index
    %c0_4 = arith.constant 0 : index
    %3 = vector.load %arg1[%c0_3, %c0_4] : memref<8x256xf32, #tpu.memory_space<vmem>>, vector<8x256xf32>
    %c0_5 = arith.constant 0 : index
    %c0_6 = arith.constant 0 : index
    %4 = vector.load %arg5[%c0_5, %c0_6] : memref<256x32xf32, #tpu.memory_space<vmem>>, vector<256x32xf32>
    %cst_7 = arith.constant dense<0.000000e+00> : vector<8x32xf32>
    %5 = tpu.matmul %3, %4, %cst_7 {dimension_numbers = #tpu.dot_dimension_numbers<[1], [0], [0], [1], [0, 0, 1, 1], [], []>} : vector<8x256xf32>, vector<256x32xf32>, vector<8x32xf32> -> vector<8x32xf32>
    %c0_8 = arith.constant 0 : index
    %c0_9 = arith.constant 0 : index
    %6 = vector.load %arg2[%c0_8, %c0_9] : memref<8x256xf32, #tpu.memory_space<vmem>>, vector<8x256xf32>
    %c0_10 = arith.constant 0 : index
    %c0_11 = arith.constant 0 : index
    %7 = vector.load %arg6[%c0_10, %c0_11] : memref<256x32xf32, #tpu.memory_space<vmem>>, vector<256x32xf32>
    %cst_12 = arith.constant dense<0.000000e+00> : vector<8x32xf32>
    %8 = tpu.matmul %6, %7, %cst_12 {dimension_numbers = #tpu.dot_dimension_numbers<[1], [0], [0], [1], [0, 0, 1, 1], [], []>} : vector<8x256xf32>, vector<256x32xf32>, vector<8x32xf32> -> vector<8x32xf32>
    %9 = arith.addf %5, %8 : vector<8x32xf32>
    %10 = vector.extract_strided_slice %2 {offsets = [0, 0], sizes = [8, 32], strides = [1, 1]} : vector<8x64xf32> to vector<8x32xf32>
    %11 = arith.addf %9, %10 : vector<8x32xf32>
    %c0_13 = arith.constant 0 : index
    %c0_14 = arith.constant 0 : index
    %12 = vector.load %arg4[%c0_13, %c0_14] : memref<8x256xf32, #tpu.memory_space<vmem>>, vector<8x256xf32>
    %c0_15 = arith.constant 0 : index
    %c0_16 = arith.constant 0 : index
    %13 = vector.load %arg8[%c0_15, %c0_16] : memref<256x32xf32, #tpu.memory_space<vmem>>, vector<256x32xf32>
    %cst_17 = arith.constant dense<0.000000e+00> : vector<8x32xf32>
    %14 = tpu.matmul %12, %13, %cst_17 {dimension_numbers = #tpu.dot_dimension_numbers<[1], [0], [0], [1], [0, 0, 1, 1], [], []>} : vector<8x256xf32>, vector<256x32xf32>, vector<8x32xf32> -> vector<8x32xf32>
    %15 = vector.extract_strided_slice %2 {offsets = [0, 32], sizes = [8, 32], strides = [1, 1]} : vector<8x64xf32> to vector<8x32xf32>
    %16 = arith.addf %14, %15 : vector<8x32xf32>
    %cst_18 = arith.constant 0.000000e+00 : f32
    %17 = vector.broadcast %cst_18 : f32 to vector<8x32xf32>
    %18 = arith.maximumf %16, %17 : vector<8x32xf32>
    %cst_19 = arith.constant 0.000000e+00 : f32
    %19 = vector.broadcast %cst_19 : f32 to vector<8x32xf32>
    %20 = arith.maximumf %11, %19 : vector<8x32xf32>
    %21 = tpu.concatenate %18, %20 in 0 : vector<8x32xf32>, vector<8x32xf32> -> vector<16x32xf32>
    %c0_20 = arith.constant 0 : index
    %c0_21 = arith.constant 0 : index
    %22 = vector.load %arg9[%c0_20, %c0_21] : memref<32x64xf32, #tpu.memory_space<vmem>>, vector<32x64xf32>
    %cst_22 = arith.constant dense<0.000000e+00> : vector<16x64xf32>
    %23 = tpu.matmul %21, %22, %cst_22 {dimension_numbers = #tpu.dot_dimension_numbers<[1], [0], [0], [1], [0, 0, 1, 1], [], []>} : vector<16x32xf32>, vector<32x64xf32>, vector<16x64xf32> -> vector<16x64xf32>
    %cst_23 = arith.constant 0.000000e+00 : f32
    %24 = vector.broadcast %cst_23 : f32 to vector<16x64xf32>
    %25 = arith.maximumf %23, %24 : vector<16x64xf32>
    %c0_24 = arith.constant 0 : index
    %c0_25 = arith.constant 0 : index
    %26 = vector.load %arg10[%c0_24, %c0_25] : memref<64x128xf32, #tpu.memory_space<vmem>>, vector<64x128xf32>
    %cst_26 = arith.constant dense<0.000000e+00> : vector<16x128xf32>
    %27 = tpu.matmul %25, %26, %cst_26 {dimension_numbers = #tpu.dot_dimension_numbers<[1], [0], [0], [1], [0, 0, 1, 1], [], []>} : vector<16x64xf32>, vector<64x128xf32>, vector<16x128xf32> -> vector<16x128xf32>
    %cst_27 = arith.constant 0.000000e+00 : f32
    %28 = vector.broadcast %cst_27 : f32 to vector<16x128xf32>
    %29 = arith.maximumf %27, %28 : vector<16x128xf32>
    %c0_28 = arith.constant 0 : index
    %c0_29 = arith.constant 0 : index
    %30 = vector.load %arg11[%c0_28, %c0_29] : memref<128x8xf32, #tpu.memory_space<vmem>>, vector<128x8xf32>
    %cst_30 = arith.constant dense<0.000000e+00> : vector<16x8xf32>
    %31 = tpu.matmul %29, %30, %cst_30 {dimension_numbers = #tpu.dot_dimension_numbers<[1], [0], [0], [1], [0, 0, 1, 1], [], []>} : vector<16x128xf32>, vector<128x8xf32>, vector<16x8xf32> -> vector<16x8xf32>
    %cst_31 = arith.constant 0.000000e+00 : f32
    %32 = vector.broadcast %cst_31 : f32 to vector<16x8xf32>
    %33 = arith.maximumf %31, %32 : vector<16x8xf32>
    %34 = vector.extract_strided_slice %33 {offsets = [0, 0], sizes = [8, 8], strides = [1, 1]} : vector<16x8xf32> to vector<8x8xf32>
    %35 = vector.extract_strided_slice %33 {offsets = [8, 0], sizes = [8, 8], strides = [1, 1]} : vector<16x8xf32> to vector<8x8xf32>
    %36 = arith.subf %34, %35 : vector<8x8xf32>
    %c0_32 = arith.constant 0 : index
    %c0_33 = arith.constant 0 : index
    %37 = vector.load %arg12[%c0_32, %c0_33] : memref<8x8xf32, #tpu.memory_space<vmem>>, vector<8x8xf32>
    tpu.vector_store %arg12[%c0_32, %c0_33], %36 {strides = array<i32>} : memref<8x8xf32, #tpu.memory_space<vmem>>, vector<8x8xf32>,
    return
  }
  func.func @transform_0(%arg0: i32) -> (i32, i32) {
    %c0_i32 = arith.constant 0 : i32
    %c0_i32_0 = arith.constant 0 : i32
    return %arg0, %c0_i32 : i32, i32
  }
  func.func @transform_1(%arg0: i32) -> (i32, i32) {
    %c0_i32 = arith.constant 0 : i32
    %c0_i32_0 = arith.constant 0 : i32
    return %arg0, %c0_i32 : i32, i32
  }
  func.func @transform_2(%arg0: i32) -> (i32, i32) {
    %c0_i32 = arith.constant 0 : i32
    %c0_i32_0 = arith.constant 0 : i32
    return %arg0, %c0_i32 : i32, i32
  }
  func.func @transform_3(%arg0: i32) -> (i32, i32) {
    %c0_i32 = arith.constant 0 : i32
    %c0_i32_0 = arith.constant 0 : i32
    return %arg0, %c0_i32 : i32, i32
  }
  func.func @transform_4(%arg0: i32) -> (i32, i32) {
    %c0_i32 = arith.constant 0 : i32
    %c0_i32_0 = arith.constant 0 : i32
    %c0_i32_1 = arith.constant 0 : i32
    return %c0_i32, %c0_i32_0 : i32, i32
  }
  func.func @transform_5(%arg0: i32) -> (i32, i32) {
    %c0_i32 = arith.constant 0 : i32
    %c0_i32_0 = arith.constant 0 : i32
    %c0_i32_1 = arith.constant 0 : i32
    return %c0_i32, %c0_i32_0 : i32, i32
  }
  func.func @transform_6(%arg0: i32) -> (i32, i32) {
    %c0_i32 = arith.constant 0 : i32
    %c0_i32_0 = arith.constant 0 : i32
    %c0_i32_1 = arith.constant 0 : i32
    return %c0_i32, %c0_i32_0 : i32, i32
  }
  func.func @transform_7(%arg0: i32) -> (i32, i32) {
    %c0_i32 = arith.constant 0 : i32
    %c0_i32_0 = arith.constant 0 : i32
    %c0_i32_1 = arith.constant 0 : i32
    return %c0_i32, %c0_i32_0 : i32, i32
  }
  func.func @transform_8(%arg0: i32) -> (i32, i32) {
    %c0_i32 = arith.constant 0 : i32
    %c0_i32_0 = arith.constant 0 : i32
    %c0_i32_1 = arith.constant 0 : i32
    return %c0_i32, %c0_i32_0 : i32, i32
  }
  func.func @transform_9(%arg0: i32) -> (i32, i32) {
    %c0_i32 = arith.constant 0 : i32
    %c0_i32_0 = arith.constant 0 : i32
    %c0_i32_1 = arith.constant 0 : i32
    return %c0_i32, %c0_i32_0 : i32, i32
  }
  func.func @transform_10(%arg0: i32) -> (i32, i32) {
    %c0_i32 = arith.constant 0 : i32
    %c0_i32_0 = arith.constant 0 : i32
    %c0_i32_1 = arith.constant 0 : i32
    return %c0_i32, %c0_i32_0 : i32, i32
  }
  func.func @transform_11(%arg0: i32) -> (i32, i32) {
    %c0_i32 = arith.constant 0 : i32
    %c0_i32_0 = arith.constant 0 : i32
    return %arg0, %c0_i32 : i32, i32
  }
}

</mosaic_0001>

<llo_original>
// kernel: tpu_custom_call.1
$region0: #{tpu_custom_call.1}
  #allocation0 [shape = 'u32[]', space=smem, size = 0x4, offset = 0x4, fixed_abs, tag = 'smem constant byte address 0x4 - core index']
  #allocation1 [shape = 'u32[144,128]{1,0:T(1,128)}', space=vmem, size = 0x12000, scoped, tag = 'internal scratch']
  %s0 = inlined_call_operand.vmem [shape: f32[16,256], index: 0, kind: input, shape index: {}]
  %s1 = inlined_call_operand.vmem [shape: f32[16,256], index: 1, kind: input, shape index: {}]
  %s2 = inlined_call_operand.vmem [shape: f32[16,256], index: 2, kind: input, shape index: {}]
  %s3 = inlined_call_operand.vmem [shape: f32[16,256], index: 3, kind: input, shape index: {}]
  %s4 = inlined_call_operand.vmem [shape: f32[256,32], index: 4, kind: input, shape index: {}]
  %s5 = inlined_call_operand.vmem [shape: f32[256,32], index: 5, kind: input, shape index: {}]
  %s6 = inlined_call_operand.vmem [shape: f32[256,64], index: 6, kind: input, shape index: {}]
  %s7 = inlined_call_operand.vmem [shape: f32[256,32], index: 7, kind: input, shape index: {}]
  %s8 = inlined_call_operand.vmem [shape: f32[32,64], index: 8, kind: input, shape index: {}]
  %s9 = inlined_call_operand.vmem [shape: f32[64,128], index: 9, kind: input, shape index: {}]
  %s10 = inlined_call_operand.vmem [shape: f32[128,8], index: 10, kind: input, shape index: {}]
  %s11 = inlined_call_operand.vmem [shape: f32[16,8], index: 11, kind: output, shape index: {}]
  %s12 = sld [smem:[#allocation0]]
  $region77: #{tpu_custom_call.1} parent=0
    _
  %s14 = ssub.s32 1, %s12
  %s15 = scalar_select 0, %s14, %s12
  loop: start=0, step=1, limit=4
  $region2: #{tpu_custom_call.1} parent=0 // loop_pre_header
    _
  $region3: #{tpu_custom_call.1} parent=0 // loop_header
    %s17 = sphi 0, %s21
    %p18 = scmp.ge.s32.totalorder %s17, 4
    %s27 = sphi 0, %s29
    %s30 = sphi 0, %s27
    %s31 = sphi 0, %s30
    %s47 = sphi 0, %s31
    %s53 = sphi 0, %s55
    %s56 = sphi 0, %s53
    %s57 = sphi 0, %s56
    %s73 = sphi 0, %s57
    %s79 = sphi 0, %s81
    %s82 = sphi 0, %s79
    %s83 = sphi 0, %s82
    %s99 = sphi 0, %s83
    %s105 = sphi 0, %s107
    %s108 = sphi 0, %s105
    %s109 = sphi 0, %s108
    %s125 = sphi 0, %s109
    %s129 = sphi 0, %s129
    %s131 = sphi 0, %s129
    %s132 = sphi 0, %s131
    %s146 = sphi 0, %s132
    %s150 = sphi 0, %s150
    %s152 = sphi 0, %s150
    %s153 = sphi 0, %s152
    %s167 = sphi 0, %s153
    %s171 = sphi 0, %s171
    %s173 = sphi 0, %s171
    %s174 = sphi 0, %s173
    %s188 = sphi 0, %s174
    %s192 = sphi 0, %s192
    %s194 = sphi 0, %s192
    %s195 = sphi 0, %s194
    %s209 = sphi 0, %s195
    %s213 = sphi 0, %s213
    %s215 = sphi 0, %s213
    %s216 = sphi 0, %s215
    %s230 = sphi 0, %s216
    %s234 = sphi 0, %s234
    %s236 = sphi 0, %s234
    %s237 = sphi 0, %s236
    %s251 = sphi 0, %s237
    %s255 = sphi 0, %s255
    %s257 = sphi 0, %s255
    %s258 = sphi 0, %s257
    %s272 = sphi 0, %s258
    %s278 = sphi 0, %s280
    %s281 = sphi 0, %s278
    %s282 = sphi 0, %s281
    %s298 = sphi 0, %s282
  $region4: #{tpu_custom_call.1} parent=0 // loop_header_branch
    %20 = sbr.rel (%p18) target = $region8
  $region5: #{tpu_custom_call.1} parent=0 // loop_body
    %s22 = ssub.s32 %s17, 1
    %s23 = ssub.s32 %s17, 2
    %s24 = sadd.s32 %s17, 1
    %s25 = ssub.s32 %s17, %s24
    %p26 = scmp.eq.s32.totalorder %s25, 0
    %s28 = sadd.s32 %s27, 1
    %s29 = scalar_select %p26, %s27, %s28
    %p32 = pneg %p26
    %p33 = scmp.eq.s32.totalorder %s17, 1
    %p34 = por %p32, %p33
    %p35 = scmp.ne.s32.totalorder %s27, %s30
    %p36 = scmp.eq.s32.totalorder %s17, 0
    %p37 = por %p35, %p36
    %p38 = scmp.ne.s32.totalorder %s27, %s30
    %p39 = scmp.eq.s32.totalorder %s22, 1
    %p40 = por %p38, %p39
    %p41 = scmp.ne.s32.totalorder %s30, %s31
    %p42 = scmp.eq.s32.totalorder %s22, 0
    %p43 = por %p41, %p42
    %p44 = scmp.ne.s32.totalorder %s30, %s31
    %p45 = scmp.eq.s32.totalorder %s23, 1
    %p46 = por %p44, %p45
    %p48 = scmp.ne.s32.totalorder %s31, %s47
    %p49 = scmp.eq.s32.totalorder %s23, 0
    %p50 = por %p48, %p49
    %s51 = ssub.s32 %s17, %s24
    %p52 = scmp.eq.s32.totalorder %s51, 0
    %s54 = sadd.s32 %s53, 1
    %s55 = scalar_select %p52, %s53, %s54
    %p58 = pneg %p52
    %p59 = scmp.eq.s32.totalorder %s17, 1
    %p60 = por %p58, %p59
    %p61 = scmp.ne.s32.totalorder %s53, %s56
    %p62 = scmp.eq.s32.totalorder %s17, 0
    %p63 = por %p61, %p62
    %p64 = scmp.ne.s32.totalorder %s53, %s56
    %p65 = scmp.eq.s32.totalorder %s22, 1
    %p66 = por %p64, %p65
    %p67 = scmp.ne.s32.totalorder %s56, %s57
    %p68 = scmp.eq.s32.totalorder %s22, 0
    %p69 = por %p67, %p68
    %p70 = scmp.ne.s32.totalorder %s56, %s57
    %p71 = scmp.eq.s32.totalorder %s23, 1
    %p72 = por %p70, %p71
    %p74 = scmp.ne.s32.totalorder %s57, %s73
    %p75 = scmp.eq.s32.totalorder %s23, 0
    %p76 = por %p74, %p75
    %s77 = ssub.s32 %s17, %s24
    %p78 = scmp.eq.s32.totalorder %s77, 0
    %s80 = sadd.s32 %s79, 1
    %s81 = scalar_select %p78, %s79, %s80
    %p84 = pneg %p78
    %p85 = scmp.eq.s32.totalorder %s17, 1
    %p86 = por %p84, %p85
    %p87 = scmp.ne.s32.totalorder %s79, %s82
    %p88 = scmp.eq.s32.totalorder %s17, 0
    %p89 = por %p87, %p88
    %p90 = scmp.ne.s32.totalorder %s79, %s82
    %p91 = scmp.eq.s32.totalorder %s22, 1
    %p92 = por %p90, %p91
    %p93 = scmp.ne.s32.totalorder %s82, %s83
    %p94 = scmp.eq.s32.totalorder %s22, 0
    %p95 = por %p93, %p94
    %p96 = scmp.ne.s32.totalorder %s82, %s83
    %p97 = scmp.eq.s32.totalorder %s23, 1
    %p98 = por %p96, %p97
    %p100 = scmp.ne.s32.totalorder %s83, %s99
    %p101 = scmp.eq.s32.totalorder %s23, 0
    %p102 = por %p100, %p101
    %s103 = ssub.s32 %s17, %s24
    %p104 = scmp.eq.s32.totalorder %s103, 0
    %s106 = sadd.s32 %s105, 1
    %s107 = scalar_select %p104, %s105, %s106
    %p110 = pneg %p104
    %p111 = scmp.eq.s32.totalorder %s17, 1
    %p112 = por %p110, %p111
    %p113 = scmp.ne.s32.totalorder %s105, %s108
    %p114 = scmp.eq.s32.totalorder %s17, 0
    %p115 = por %p113, %p114
    %p116 = scmp.ne.s32.totalorder %s105, %s108
    %p117 = scmp.eq.s32.totalorder %s22, 1
    %p118 = por %p116, %p117
    %p119 = scmp.ne.s32.totalorder %s108, %s109
    %p120 = scmp.eq.s32.totalorder %s22, 0
    %p121 = por %p119, %p120
    %p122 = scmp.ne.s32.totalorder %s108, %s109
    %p123 = scmp.eq.s32.totalorder %s23, 1
    %p124 = por %p122, %p123
    %p126 = scmp.ne.s32.totalorder %s109, %s125
    %p127 = scmp.eq.s32.totalorder %s23, 0
    %p128 = por %p126, %p127
    %s130 = sadd.s32 %s129, 1
    %p133 = scmp.eq.s32.totalorder %s17, 1
    %p134 = scmp.ne.s32.totalorder %s129, %s131
    %p135 = scmp.eq.s32.totalorder %s17, 0
    %p136 = por %p134, %p135
    %p137 = scmp.ne.s32.totalorder %s129, %s131
    %p138 = scmp.eq.s32.totalorder %s22, 1
    %p139 = por %p137, %p138
    %p140 = scmp.ne.s32.totalorder %s131, %s132
    %p141 = scmp.eq.s32.totalorder %s22, 0
    %p142 = por %p140, %p141
    %p143 = scmp.ne.s32.totalorder %s131, %s132
    %p144 = scmp.eq.s32.totalorder %s23, 1
    %p145 = por %p143, %p144
    %p147 = scmp.ne.s32.totalorder %s132, %s146
    %p148 = scmp.eq.s32.totalorder %s23, 0
    %p149 = por %p147, %p148
    %s151 = sadd.s32 %s150, 1
    %p154 = scmp.eq.s32.totalorder %s17, 1
    %p155 = scmp.ne.s32.totalorder %s150, %s152
    %p156 = scmp.eq.s32.totalorder %s17, 0
    %p157 = por %p155, %p156
    %p158 = scmp.ne.s32.totalorder %s150, %s152
    %p159 = scmp.eq.s32.totalorder %s22, 1
    %p160 = por %p158, %p159
    %p161 = scmp.ne.s32.totalorder %s152, %s153
    %p162 = scmp.eq.s32.totalorder %s22, 0
    %p163 = por %p161, %p162
    %p164 = scmp.ne.s32.totalorder %s152, %s153
    %p165 = scmp.eq.s32.totalorder %s23, 1
    %p166 = por %p164, %p165
    %p168 = scmp.ne.s32.totalorder %s153, %s167
    %p169 = scmp.eq.s32.totalorder %s23, 0
    %p170 = por %p168, %p169
    %s172 = sadd.s32 %s171, 1
    %p175 = scmp.eq.s32.totalorder %s17, 1
    %p176 = scmp.ne.s32.totalorder %s171, %s173
    %p177 = scmp.eq.s32.totalorder %s17, 0
    %p178 = por %p176, %p177
    %p179 = scmp.ne.s32.totalorder %s171, %s173
    %p180 = scmp.eq.s32.totalorder %s22, 1
    %p181 = por %p179, %p180
    %p182 = scmp.ne.s32.totalorder %s173, %s174
    %p183 = scmp.eq.s32.totalorder %s22, 0
    %p184 = por %p182, %p183
    %p185 = scmp.ne.s32.totalorder %s173, %s174
    %p186 = scmp.eq.s32.totalorder %s23, 1
    %p187 = por %p185, %p186
    %p189 = scmp.ne.s32.totalorder %s174, %s188
    %p190 = scmp.eq.s32.totalorder %s23, 0
    %p191 = por %p189, %p190
    %s193 = sadd.s32 %s192, 1
    %p196 = scmp.eq.s32.totalorder %s17, 1
    %p197 = scmp.ne.s32.totalorder %s192, %s194
    %p198 = scmp.eq.s32.totalorder %s17, 0
    %p199 = por %p197, %p198
    %p200 = scmp.ne.s32.totalorder %s192, %s194
    %p201 = scmp.eq.s32.totalorder %s22, 1
    %p202 = por %p200, %p201
    %p203 = scmp.ne.s32.totalorder %s194, %s195
    %p204 = scmp.eq.s32.totalorder %s22, 0
    %p205 = por %p203, %p204
    %p206 = scmp.ne.s32.totalorder %s194, %s195
    %p207 = scmp.eq.s32.totalorder %s23, 1
    %p208 = por %p206, %p207
    %p210 = scmp.ne.s32.totalorder %s195, %s209
    %p211 = scmp.eq.s32.totalorder %s23, 0
    %p212 = por %p210, %p211
    %s214 = sadd.s32 %s213, 1
    %p217 = scmp.eq.s32.totalorder %s17, 1
    %p218 = scmp.ne.s32.totalorder %s213, %s215
    %p219 = scmp.eq.s32.totalorder %s17, 0
    %p220 = por %p218, %p219
    %p221 = scmp.ne.s32.totalorder %s213, %s215
    %p222 = scmp.eq.s32.totalorder %s22, 1
    %p223 = por %p221, %p222
    %p224 = scmp.ne.s32.totalorder %s215, %s216
    %p225 = scmp.eq.s32.totalorder %s22, 0
    %p226 = por %p224, %p225
    %p227 = scmp.ne.s32.totalorder %s215, %s216
    %p228 = scmp.eq.s32.totalorder %s23, 1
    %p229 = por %p227, %p228
    %p231 = scmp.ne.s32.totalorder %s216, %s230
    %p232 = scmp.eq.s32.totalorder %s23, 0
    %p233 = por %p231, %p232
    %s235 = sadd.s32 %s234, 1
    %p238 = scmp.eq.s32.totalorder %s17, 1
    %p239 = scmp.ne.s32.totalorder %s234, %s236
    %p240 = scmp.eq.s32.totalorder %s17, 0
    %p241 = por %p239, %p240
    %p242 = scmp.ne.s32.totalorder %s234, %s236
    %p243 = scmp.eq.s32.totalorder %s22, 1
    %p244 = por %p242, %p243
    %p245 = scmp.ne.s32.totalorder %s236, %s237
    %p246 = scmp.eq.s32.totalorder %s22, 0
    %p247 = por %p245, %p246
    %p248 = scmp.ne.s32.totalorder %s236, %s237
    %p249 = scmp.eq.s32.totalorder %s23, 1
    %p250 = por %p248, %p249
    %p252 = scmp.ne.s32.totalorder %s237, %s251
    %p253 = scmp.eq.s32.totalorder %s23, 0
    %p254 = por %p252, %p253
    %s256 = sadd.s32 %s255, 1
    %p259 = scmp.eq.s32.totalorder %s17, 1
    %p260 = scmp.ne.s32.totalorder %s255, %s257
    %p261 = scmp.eq.s32.totalorder %s17, 0
    %p262 = por %p260, %p261
    %p263 = scmp.ne.s32.totalorder %s255, %s257
    %p264 = scmp.eq.s32.totalorder %s22, 1
    %p265 = por %p263, %p264
    %p266 = scmp.ne.s32.totalorder %s257, %s258
    %p267 = scmp.eq.s32.totalorder %s22, 0
    %p268 = por %p266, %p267
    %p269 = scmp.ne.s32.totalorder %s257, %s258
    %p270 = scmp.eq.s32.totalorder %s23, 1
    %p271 = por %p269, %p270
    %p273 = scmp.ne.s32.totalorder %s258, %s272
    %p274 = scmp.eq.s32.totalorder %s23, 0
    %p275 = por %p273, %p274
    %s276 = ssub.s32 %s17, %s24
    %p277 = scmp.eq.s32.totalorder %s276, 0
    %s279 = sadd.s32 %s278, 1
    %s280 = scalar_select %p277, %s278, %s279
    %p283 = pneg %p277
    %p284 = scmp.eq.s32.totalorder %s17, 1
    %p285 = por %p283, %p284
    %p286 = scmp.ne.s32.totalorder %s278, %s281
    %p287 = scmp.eq.s32.totalorder %s17, 0
    %p288 = por %p286, %p287
    %p289 = scmp.ne.s32.totalorder %s278, %s281
    %p290 = scmp.eq.s32.totalorder %s22, 1
    %p291 = por %p289, %p290
    %p292 = scmp.ne.s32.totalorder %s281, %s282
    %p293 = scmp.eq.s32.totalorder %s22, 0
    %p294 = por %p292, %p293
    %p295 = scmp.ne.s32.totalorder %s281, %s282
    %p296 = scmp.eq.s32.totalorder %s23, 1
    %p297 = por %p295, %p296
    %p299 = scmp.ne.s32.totalorder %s282, %s298
    %p300 = scmp.eq.s32.totalorder %s23, 0
    %p301 = por %p299, %p300
    %p302 = scmp.le.s32.totalorder 1, %s17
    %p303 = scmp.lt.s32.totalorder %s17, 3
    %p304 = pnand %p302, %p303
    %p305 = pneg %p304
    // Predicated region
    $region9: #{tpu_custom_call.1} parent=5 // pred_check
      _
    $region10: #{tpu_custom_call.1} parent=5 // pred_check_branch
      %307 = sbr.rel (%p304) target = $region12
    $region11: #{tpu_custom_call.1} parent=5 // pred_region
      %s308 = ssub.s32 %s17, 1
      // Predicated region
      $region13: #{tpu_custom_call.1} parent=11 // pred_check
        %p309 = pneg %p142
      $region14: #{tpu_custom_call.1} parent=11 // pred_check_branch
        %311 = sbr.rel (%p309) target = $region16
      $region15: #{tpu_custom_call.1} parent=11 // pred_region
        _
      $region16: #{tpu_custom_call.1} parent=11 // pred_fallthru
        _
      // Predicated region
      $region17: #{tpu_custom_call.1} parent=11 // pred_check
        %p312 = pneg %p163
      $region18: #{tpu_custom_call.1} parent=11 // pred_check_branch
        %314 = sbr.rel (%p312) target = $region20
      $region19: #{tpu_custom_call.1} parent=11 // pred_region
        _
      $region20: #{tpu_custom_call.1} parent=11 // pred_fallthru
        _
      // Predicated region
      $region21: #{tpu_custom_call.1} parent=11 // pred_check
        %p315 = pneg %p184
      $region22: #{tpu_custom_call.1} parent=11 // pred_check_branch
        %317 = sbr.rel (%p315) target = $region24
      $region23: #{tpu_custom_call.1} parent=11 // pred_region
        _
      $region24: #{tpu_custom_call.1} parent=11 // pred_fallthru
        _
      // Predicated region
      $region25: #{tpu_custom_call.1} parent=11 // pred_check
        %p318 = pneg %p205
      $region26: #{tpu_custom_call.1} parent=11 // pred_check_branch
        %320 = sbr.rel (%p318) target = $region28
      $region27: #{tpu_custom_call.1} parent=11 // pred_region
        _
      $region28: #{tpu_custom_call.1} parent=11 // pred_fallthru
        _
      // Predicated region
      $region29: #{tpu_custom_call.1} parent=11 // pred_check
        %p321 = pneg %p226
      $region30: #{tpu_custom_call.1} parent=11 // pred_check_branch
        %323 = sbr.rel (%p321) target = $region32
      $region31: #{tpu_custom_call.1} parent=11 // pred_region
        _
      $region32: #{tpu_custom_call.1} parent=11 // pred_fallthru
        _
      // Predicated region
      $region33: #{tpu_custom_call.1} parent=11 // pred_check
        %p324 = pneg %p247
      $region34: #{tpu_custom_call.1} parent=11 // pred_check_branch
        %326 = sbr.rel (%p324) target = $region36
      $region35: #{tpu_custom_call.1} parent=11 // pred_region
        _
      $region36: #{tpu_custom_call.1} parent=11 // pred_fallthru
        _
      // Predicated region
      $region37: #{tpu_custom_call.1} parent=11 // pred_check
        %p327 = pneg %p268
      $region38: #{tpu_custom_call.1} parent=11 // pred_check_branch
        %329 = sbr.rel (%p327) target = $region40
      $region39: #{tpu_custom_call.1} parent=11 // pred_region
        _
      $region40: #{tpu_custom_call.1} parent=11 // pred_fallthru
        _
    $region12: #{tpu_custom_call.1} parent=5 // pred_fallthru
      _
    %p330 = scmp.lt.s32.totalorder %s17, 2
    // Predicated region
    $region41: #{tpu_custom_call.1} parent=5 // pred_check
      %p331 = pneg %p330
    $region42: #{tpu_custom_call.1} parent=5 // pred_check_branch
      %333 = sbr.rel (%p331) target = $region44
    $region43: #{tpu_custom_call.1} parent=5 // pred_region
      // Predicated region
      $region45: #{tpu_custom_call.1} parent=43 // pred_check
        %p334 = pneg %p37
      $region46: #{tpu_custom_call.1} parent=43 // pred_check_branch
        %336 = sbr.rel (%p334) target = $region48
      $region47: #{tpu_custom_call.1} parent=43 // pred_region
        %p337 = scmp.lt.s32.totalorder %s17, 1
        %s338 = scalar_select %p337, %s17, 1
        %s339 = smul.addr %s338, 2
        %s340 = smul.addr %s339, 8
        %s341 = scalar_lea.vmem %s0, %s340
      $region48: #{tpu_custom_call.1} parent=43 // pred_fallthru
        _
      // Predicated region
      $region49: #{tpu_custom_call.1} parent=43 // pred_check
        %p342 = pneg %p63
      $region50: #{tpu_custom_call.1} parent=43 // pred_check_branch
        %344 = sbr.rel (%p342) target = $region52
      $region51: #{tpu_custom_call.1} parent=43 // pred_region
        %p345 = scmp.lt.s32.totalorder %s17, 1
        %s346 = scalar_select %p345, %s17, 1
        %s347 = smul.addr %s346, 2
        %s348 = smul.addr %s347, 8
        %s349 = scalar_lea.vmem %s1, %s348
      $region52: #{tpu_custom_call.1} parent=43 // pred_fallthru
        _
      // Predicated region
      $region53: #{tpu_custom_call.1} parent=43 // pred_check
        %p350 = pneg %p89
      $region54: #{tpu_custom_call.1} parent=43 // pred_check_branch
        %352 = sbr.rel (%p350) target = $region56
      $region55: #{tpu_custom_call.1} parent=43 // pred_region
        %p353 = scmp.lt.s32.totalorder %s17, 1
        %s354 = scalar_select %p353, %s17, 1
        %s355 = smul.addr %s354, 2
        %s356 = smul.addr %s355, 8
        %s357 = scalar_lea.vmem %s2, %s356
      $region56: #{tpu_custom_call.1} parent=43 // pred_fallthru
        _
      // Predicated region
      $region57: #{tpu_custom_call.1} parent=43 // pred_check
        %p358 = pneg %p115
      $region58: #{tpu_custom_call.1} parent=43 // pred_check_branch
        %360 = sbr.rel (%p358) target = $region60
      $region59: #{tpu_custom_call.1} parent=43 // pred_region
        %p361 = scmp.lt.s32.totalorder %s17, 1
        %s362 = scalar_select %p361, %s17, 1
        %s363 = smul.addr %s362, 2
        %s364 = smul.addr %s363, 8
        %s365 = scalar_lea.vmem %s3, %s364
      $region60: #{tpu_custom_call.1} parent=43 // pred_fallthru
        _
    $region44: #{tpu_custom_call.1} parent=5 // pred_fallthru
      _
    %p366 = scmp.le.s32.totalorder 1, %s17
    %p367 = scmp.lt.s32.totalorder %s17, 3
    %p368 = pnand %p366, %p367
    %p369 = pneg %p368
    // Predicated region
    $region61: #{tpu_custom_call.1} parent=5 // pred_check
      _
    $region62: #{tpu_custom_call.1} parent=5 // pred_check_branch
      %371 = sbr.rel (%p368) target = $region64
    $region63: #{tpu_custom_call.1} parent=5 // pred_region
      %s372 = ssub.s32 %s17, 1
      %p373 = scmp.lt.s32.totalorder %s22, 1
      %s374 = scalar_select %p373, %s22, 1
      %s375 = smul.addr %s374, 2
      %s376 = smul.addr %s375, 8
      %s377 = scalar_lea.vmem %s0, %s376
      %p378 = pneg %p43
      %p379 = pneg %p40
      %p380 = scmp.lt.s32.totalorder %s22, 1
      %s381 = scalar_select %p380, %s22, 1
      %s382 = smul.addr %s381, 2
      %s383 = smul.addr %s382, 8
      %s384 = scalar_lea.vmem %s1, %s383
      %p385 = pneg %p69
      %p386 = pneg %p66
      %p387 = scmp.lt.s32.totalorder %s22, 1
      %s388 = scalar_select %p387, %s22, 1
      %s389 = smul.addr %s388, 2
      %s390 = smul.addr %s389, 8
      %s391 = scalar_lea.vmem %s2, %s390
      %p392 = pneg %p95
      %p393 = pneg %p92
      %p394 = scmp.lt.s32.totalorder %s22, 1
      %s395 = scalar_select %p394, %s22, 1
      %s396 = smul.addr %s395, 2
      %s397 = smul.addr %s396, 8
      %s398 = scalar_lea.vmem %s3, %s397
      %p399 = pneg %p121
      %p400 = pneg %p118
      %p401 = pneg %p142
      %p402 = pneg %p139
      %p403 = pneg %p163
      %p404 = pneg %p160
      %p405 = pneg %p184
      %p406 = pneg %p181
      %p407 = pneg %p205
      %p408 = pneg %p202
      %p409 = pneg %p226
      %p410 = pneg %p223
      %p411 = pneg %p247
      %p412 = pneg %p244
      %p413 = pneg %p268
      %p414 = pneg %p265
      %p415 = pneg %p294
      %p416 = pneg %p291
      %p417 = scmp.lt.s32.totalorder %s22, 1
      %s418 = scalar_select %p417, %s22, 1
      %s419 = smul.addr %s418, 8
      %s420 = scalar_lea.vmem %s11, %s419
      %p421 = scmp.lt.s32.totalorder %s22, 1
      %s422 = scalar_select %p421, %s22, 1
      %s423 = smul.addr %s422, 2
      %s424 = smul.addr %s423, 8
      %s425 = scalar_lea.vmem %s0, %s424
      %p426 = scmp.lt.s32.totalorder %s22, 1
      %s427 = scalar_select %p426, %s22, 1
      %s428 = smul.addr %s427, 2
      %s429 = smul.addr %s428, 8
      %s430 = scalar_lea.vmem %s1, %s429
      %p431 = scmp.lt.s32.totalorder %s22, 1
      %s432 = scalar_select %p431, %s22, 1
      %s433 = smul.addr %s432, 2
      %s434 = smul.addr %s433, 8
      %s435 = scalar_lea.vmem %s2, %s434
      %p436 = scmp.lt.s32.totalorder %s22, 1
      %s437 = scalar_select %p436, %s22, 1
      %s438 = smul.addr %s437, 2
      %s439 = smul.addr %s438, 8
      %s440 = scalar_lea.vmem %s3, %s439
      %p441 = scmp.lt.s32.totalorder %s22, 1
      %s442 = scalar_select %p441, %s22, 1
      %s443 = smul.addr %s442, 8
      %s444 = scalar_lea.vmem %s11, %s443
      %v445 = vld [vmem:[%s435] sm:$0xff]
      %v446 = vld [vmem:[%s435 + $0x8] sm:$0xff]
      %v447 = vld [vmem:[%s6] sm:$0xff]
      %v448 = vld [vmem:[%s6 + $0x8] sm:$0xff]
      %v449 = vld [vmem:[%s6 + $0x10] sm:$0xff]
      %v450 = vld [vmem:[%s6 + $0x18] sm:$0xff]
      %v451 = vld [vmem:[%s6 + $0x20] sm:$0xff]
      %v452 = vld [vmem:[%s6 + $0x28] sm:$0xff]
      %v453 = vld [vmem:[%s6 + $0x30] sm:$0xff]
      %v454 = vld [vmem:[%s6 + $0x38] sm:$0xff]
      %v455 = vld [vmem:[%s6 + $0x40] sm:$0xff]
      %v456 = vld [vmem:[%s6 + $0x48] sm:$0xff]
      %v457 = vld [vmem:[%s6 + $0x50] sm:$0xff]
      %v458 = vld [vmem:[%s6 + $0x58] sm:$0xff]
      %v459 = vld [vmem:[%s6 + $0x60] sm:$0xff]
      %v460 = vld [vmem:[%s6 + $0x68] sm:$0xff]
      %v461 = vld [vmem:[%s6 + $0x70] sm:$0xff]
      %v462 = vld [vmem:[%s6 + $0x78] sm:$0xff]
      %v463 = vld [vmem:[%s6 + $0x80] sm:$0xff]
      %v464 = vld [vmem:[%s6 + $0x88] sm:$0xff]
      %v465 = vld [vmem:[%s6 + $0x90] sm:$0xff]
      %v466 = vld [vmem:[%s6 + $0x98] sm:$0xff]
      %v467 = vld [vmem:[%s6 + $0xa0] sm:$0xff]
      %v468 = vld [vmem:[%s6 + $0xa8] sm:$0xff]
      %v469 = vld [vmem:[%s6 + $0xb0] sm:$0xff]
      %v470 = vld [vmem:[%s6 + $0xb8] sm:$0xff]
      %v471 = vld [vmem:[%s6 + $0xc0] sm:$0xff]
      %v472 = vld [vmem:[%s6 + $0xc8] sm:$0xff]
      %v473 = vld [vmem:[%s6 + $0xd0] sm:$0xff]
      %v474 = vld [vmem:[%s6 + $0xd8] sm:$0xff]
      %v475 = vld [vmem:[%s6 + $0xe0] sm:$0xff]
      %v476 = vld [vmem:[%s6 + $0xe8] sm:$0xff]
      %v477 = vld [vmem:[%s6 + $0xf0] sm:$0xff]
      %v478 = vld [vmem:[%s6 + $0xf8] sm:$0xff]
      %479 = vmatprep.subr.mxu0 0.0
      %480 = vmatpush1.msra.mxu0 %v462
      %481 = vmatprep.subr.mxu0 0.0
      %482 = vmatpush1.msra.mxu0 %v461
      %483 = vmatprep.subr.mxu0 0.0
      %484 = vmatpush1.msra.mxu0 %v460
      %485 = vmatprep.subr.mxu0 0.0
      %486 = vmatpush1.msra.mxu0 %v459
      %487 = vmatprep.subr.mxu0 0.0
      %488 = vmatpush1.msra.mxu0 %v458
      %489 = vmatprep.subr.mxu0 0.0
      %490 = vmatpush1.msra.mxu0 %v457
      %491 = vmatprep.subr.mxu0 0.0
      %492 = vmatpush1.msra.mxu0 %v456
      %493 = vmatprep.subr.mxu0 0.0
      %494 = vmatpush1.msra.mxu0 %v455
      %495 = vmatprep.subr.mxu0 0.0
      %496 = vmatpush1.msra.mxu0 %v454
      %497 = vmatprep.subr.mxu0 0.0
      %498 = vmatpush1.msra.mxu0 %v453
      %499 = vmatprep.subr.mxu0 0.0
      %500 = vmatpush1.msra.mxu0 %v452
      %501 = vmatprep.subr.mxu0 0.0
      %502 = vmatpush1.msra.mxu0 %v451
      %503 = vmatprep.subr.mxu0 0.0
      %504 = vmatpush1.msra.mxu0 %v450
      %505 = vmatprep.subr.mxu0 0.0
      %506 = vmatpush1.msra.mxu0 %v449
      %507 = vmatprep.subr.mxu0 0.0
      %508 = vmatpush1.msra.mxu0 %v448
      %509 = vmatprep.subr.mxu0 0.0
      %510 = vmatpush1.msra.mxu0 %v447
      %511 = vmatprep.subr.mxu0 0.0
      %512 = vmatpush2.msra.mxu0 %v478
      %513 = vmatprep.subr.mxu0 0.0
      %514 = vmatpush2.msra.mxu0 %v477
      %515 = vmatprep.subr.mxu0 0.0
      %516 = vmatpush2.msra.mxu0 %v476
      %517 = vmatprep.subr.mxu0 0.0
      %518 = vmatpush2.msra.mxu0 %v475
      %519 = vmatprep.subr.mxu0 0.0
      %520 = vmatpush2.msra.mxu0 %v474
      %521 = vmatprep.subr.mxu0 0.0
      %522 = vmatpush2.msra.mxu0 %v473
      %523 = vmatprep.subr.mxu0 0.0
      %524 = vmatpush2.msra.mxu0 %v472
      %525 = vmatprep.subr.mxu0 0.0
      %526 = vmatpush2.msra.mxu0 %v471
      %527 = vmatprep.subr.mxu0 0.0
      %528 = vmatpush2.msra.mxu0 %v470
      %529 = vmatprep.subr.mxu0 0.0
      %530 = vmatpush2.msra.mxu0 %v469
      %531 = vmatprep.subr.mxu0 0.0
      %532 = vmatpush2.msra.mxu0 %v468
      %533 = vmatprep.subr.mxu0 0.0
      %534 = vmatpush2.msra.mxu0 %v467
      %535 = vmatprep.subr.mxu0 0.0
      %536 = vmatpush2.msra.mxu0 %v466
      %537 = vmatprep.subr.mxu0 0.0
      %538 = vmatpush2.msra.mxu0 %v465
      %539 = vmatprep.subr.mxu0 0.0
      %540 = vmatpush2.msra.mxu0 %v464
      %541 = vmatprep.subr.mxu0 0.0
      %542 = vmatpush2.msra.mxu0 %v463
      %543 = vmatprep.mubr.f32.mxu0 %v446
      %544 = vmatmul.mubr.f32.gmra.mxu0 %v445
      %v545 = vpop.f32.mrf.mxu0
      %v546 = vadd.f32 0.0, %v545
      %v547 = vpop.f32.mrf.mxu0
      %548 = vdwg.mxu0
      %v549 = vld [vmem:[%s425] sm:$0xff]
      %v550 = vld [vmem:[%s425 + $0x8] sm:$0xff]
      %v551 = vld [vmem:[%s4] sm:$0xff]
      %v552 = vld [vmem:[%s4 + $0x8] sm:$0xff]
      %v553 = vld [vmem:[%s4 + $0x10] sm:$0xff]
      %v554 = vld [vmem:[%s4 + $0x18] sm:$0xff]
      %v555 = vld [vmem:[%s4 + $0x20] sm:$0xff]
      %v556 = vld [vmem:[%s4 + $0x28] sm:$0xff]
      %v557 = vld [vmem:[%s4 + $0x30] sm:$0xff]
      %v558 = vld [vmem:[%s4 + $0x38] sm:$0xff]
      %v559 = vld [vmem:[%s4 + $0x40] sm:$0xff]
      %v560 = vld [vmem:[%s4 + $0x48] sm:$0xff]
      %v561 = vld [vmem:[%s4 + $0x50] sm:$0xff]
      %v562 = vld [vmem:[%s4 + $0x58] sm:$0xff]
      %v563 = vld [vmem:[%s4 + $0x60] sm:$0xff]
      %v564 = vld [vmem:[%s4 + $0x68] sm:$0xff]
      %v565 = vld [vmem:[%s4 + $0x70] sm:$0xff]
      %v566 = vld [vmem:[%s4 + $0x78] sm:$0xff]
      %v567 = vld [vmem:[%s4 + $0x80] sm:$0xff]
      %v568 = vld [vmem:[%s4 + $0x88] sm:$0xff]
      %v569 = vld [vmem:[%s4 + $0x90] sm:$0xff]
      %v570 = vld [vmem:[%s4 + $0x98] sm:$0xff]
      %v571 = vld [vmem:[%s4 + $0xa0] sm:$0xff]
      %v572 = vld [vmem:[%s4 + $0xa8] sm:$0xff]
      %v573 = vld [vmem:[%s4 + $0xb0] sm:$0xff]
      %v574 = vld [vmem:[%s4 + $0xb8] sm:$0xff]
      %v575 = vld [vmem:[%s4 + $0xc0] sm:$0xff]
      %v576 = vld [vmem:[%s4 + $0xc8] sm:$0xff]
      %v577 = vld [vmem:[%s4 + $0xd0] sm:$0xff]
      %v578 = vld [vmem:[%s4 + $0xd8] sm:$0xff]
      %v579 = vld [vmem:[%s4 + $0xe0] sm:$0xff]
      %v580 = vld [vmem:[%s4 + $0xe8] sm:$0xff]
      %v581 = vld [vmem:[%s4 + $0xf0] sm:$0xff]
      %v582 = vld [vmem:[%s4 + $0xf8] sm:$0xff]
      %v583 = vld [vmem:[%s430] sm:$0xff]
      %v584 = vld [vmem:[%s430 + $0x8] sm:$0xff]
      %v585 = vld [vmem:[%s5] sm:$0xff]
      %v586 = vld [vmem:[%s5 + $0x8] sm:$0xff]
      %v587 = vld [vmem:[%s5 + $0x10] sm:$0xff]
      %v588 = vld [vmem:[%s5 + $0x18] sm:$0xff]
      %v589 = vld [vmem:[%s5 + $0x20] sm:$0xff]
      %v590 = vld [vmem:[%s5 + $0x28] sm:$0xff]
      %v591 = vld [vmem:[%s5 + $0x30] sm:$0xff]
      %v592 = vld [vmem:[%s5 + $0x38] sm:$0xff]
      %v593 = vld [vmem:[%s5 + $0x40] sm:$0xff]
      %v594 = vld [vmem:[%s5 + $0x48] sm:$0xff]
      %v595 = vld [vmem:[%s5 + $0x50] sm:$0xff]
      %v596 = vld [vmem:[%s5 + $0x58] sm:$0xff]
      %v597 = vld [vmem:[%s5 + $0x60] sm:$0xff]
      %v598 = vld [vmem:[%s5 + $0x68] sm:$0xff]
      %v599 = vld [vmem:[%s5 + $0x70] sm:$0xff]
      %v600 = vld [vmem:[%s5 + $0x78] sm:$0xff]
      %v601 = vld [vmem:[%s5 + $0x80] sm:$0xff]
      %v602 = vld [vmem:[%s5 + $0x88] sm:$0xff]
      %v603 = vld [vmem:[%s5 + $0x90] sm:$0xff]
      %v604 = vld [vmem:[%s5 + $0x98] sm:$0xff]
      %v605 = vld [vmem:[%s5 + $0xa0] sm:$0xff]
      %v606 = vld [vmem:[%s5 + $0xa8] sm:$0xff]
      %v607 = vld [vmem:[%s5 + $0xb0] sm:$0xff]
      %v608 = vld [vmem:[%s5 + $0xb8] sm:$0xff]
      %v609 = vld [vmem:[%s5 + $0xc0] sm:$0xff]
      %v610 = vld [vmem:[%s5 + $0xc8] sm:$0xff]
      %v611 = vld [vmem:[%s5 + $0xd0] sm:$0xff]
      %v612 = vld [vmem:[%s5 + $0xd8] sm:$0xff]
      %v613 = vld [vmem:[%s5 + $0xe0] sm:$0xff]
      %v614 = vld [vmem:[%s5 + $0xe8] sm:$0xff]
      %v615 = vld [vmem:[%s5 + $0xf0] sm:$0xff]
      %v616 = vld [vmem:[%s5 + $0xf8] sm:$0xff]
      %617 = vmatprep.subr.mxu0 0.0
      %618 = vmatpush1.msra.mxu0 %v600
      %619 = vmatprep.subr.mxu0 0.0
      %620 = vmatpush1.msra.mxu0 %v599
      %621 = vmatprep.subr.mxu0 0.0
      %622 = vmatpush1.msra.mxu0 %v598
      %623 = vmatprep.subr.mxu0 0.0
      %624 = vmatpush1.msra.mxu0 %v597
      %625 = vmatprep.subr.mxu0 0.0
      %626 = vmatpush1.msra.mxu0 %v596
      %627 = vmatprep.subr.mxu0 0.0
      %628 = vmatpush1.msra.mxu0 %v595
      %629 = vmatprep.subr.mxu0 0.0
      %630 = vmatpush1.msra.mxu0 %v594
      %631 = vmatprep.subr.mxu0 0.0
      %632 = vmatpush1.msra.mxu0 %v593
      %633 = vmatprep.subr.mxu0 0.0
      %634 = vmatpush1.msra.mxu0 %v592
      %635 = vmatprep.subr.mxu0 0.0
      %636 = vmatpush1.msra.mxu0 %v591
      %637 = vmatprep.subr.mxu0 0.0
      %638 = vmatpush1.msra.mxu0 %v590
      %639 = vmatprep.subr.mxu0 0.0
      %640 = vmatpush1.msra.mxu0 %v589
      %641 = vmatprep.subr.mxu0 0.0
      %642 = vmatpush1.msra.mxu0 %v588
      %643 = vmatprep.subr.mxu0 0.0
      %644 = vmatpush1.msra.mxu0 %v587
      %645 = vmatprep.subr.mxu0 0.0
      %646 = vmatpush1.msra.mxu0 %v586
      %647 = vmatprep.subr.mxu0 0.0
      %648 = vmatpush1.msra.mxu0 %v585
      %649 = vmatprep.subr.mxu0 0.0
      %650 = vmatpush2.msra.mxu0 %v616
      %651 = vmatprep.subr.mxu0 0.0
      %652 = vmatpush2.msra.mxu0 %v615
      %653 = vmatprep.subr.mxu0 0.0
      %654 = vmatpush2.msra.mxu0 %v614
      %655 = vmatprep.subr.mxu0 0.0
      %656 = vmatpush2.msra.mxu0 %v613
      %657 = vmatprep.subr.mxu0 0.0
      %658 = vmatpush2.msra.mxu0 %v612
      %659 = vmatprep.subr.mxu0 0.0
      %660 = vmatpush2.msra.mxu0 %v611
      %661 = vmatprep.subr.mxu0 0.0
      %662 = vmatpush2.msra.mxu0 %v610
      %663 = vmatprep.subr.mxu0 0.0
      %664 = vmatpush2.msra.mxu0 %v609
      %665 = vmatprep.subr.mxu0 0.0
      %666 = vmatpush2.msra.mxu0 %v608
      %667 = vmatprep.subr.mxu0 0.0
      %668 = vmatpush2.msra.mxu0 %v607
      %669 = vmatprep.subr.mxu0 0.0
      %670 = vmatpush2.msra.mxu0 %v606
      %671 = vmatprep.subr.mxu0 0.0
      %672 = vmatpush2.msra.mxu0 %v605
      %673 = vmatprep.subr.mxu0 0.0
      %674 = vmatpush2.msra.mxu0 %v604
      %675 = vmatprep.subr.mxu0 0.0
      %676 = vmatpush2.msra.mxu0 %v603
      %677 = vmatprep.subr.mxu0 0.0
      %678 = vmatpush2.msra.mxu0 %v602
      %679 = vmatprep.subr.mxu0 0.0
      %680 = vmatpush2.msra.mxu0 %v601
      %681 = vmatprep.mubr.f32.mxu0 %v584
      %682 = vmatmul.mubr.f32.gmra.mxu0 %v583
      %v683 = vpop.f32.mrf.mxu0
      %v684 = vadd.f32 0.0, %v683
      %v685 = vpop.f32.mrf.mxu0
      %686 = vdwg.mxu0
      %687 = vmatprep.subr.mxu0 0.0
      %688 = vmatpush1.msra.mxu0 %v566
      %689 = vmatprep.subr.mxu0 0.0
      %690 = vmatpush1.msra.mxu0 %v565
      %691 = vmatprep.subr.mxu0 0.0
      %692 = vmatpush1.msra.mxu0 %v564
      %693 = vmatprep.subr.mxu0 0.0
      %694 = vmatpush1.msra.mxu0 %v563
      %695 = vmatprep.subr.mxu0 0.0
      %696 = vmatpush1.msra.mxu0 %v562
      %697 = vmatprep.subr.mxu0 0.0
      %698 = vmatpush1.msra.mxu0 %v561
      %699 = vmatprep.subr.mxu0 0.0
      %700 = vmatpush1.msra.mxu0 %v560
      %701 = vmatprep.subr.mxu0 0.0
      %702 = vmatpush1.msra.mxu0 %v559
      %703 = vmatprep.subr.mxu0 0.0
      %704 = vmatpush1.msra.mxu0 %v558
      %705 = vmatprep.subr.mxu0 0.0
      %706 = vmatpush1.msra.mxu0 %v557
      %707 = vmatprep.subr.mxu0 0.0
      %708 = vmatpush1.msra.mxu0 %v556
      %709 = vmatprep.subr.mxu0 0.0
      %710 = vmatpush1.msra.mxu0 %v555
      %711 = vmatprep.subr.mxu0 0.0
      %712 = vmatpush1.msra.mxu0 %v554
      %713 = vmatprep.subr.mxu0 0.0
      %714 = vmatpush1.msra.mxu0 %v553
      %715 = vmatprep.subr.mxu0 0.0
      %716 = vmatpush1.msra.mxu0 %v552
      %717 = vmatprep.subr.mxu0 0.0
      %718 = vmatpush1.msra.mxu0 %v551
      %719 = vmatprep.subr.mxu0 0.0
      %720 = vmatpush2.msra.mxu0 %v582
      %721 = vmatprep.subr.mxu0 0.0
      %722 = vmatpush2.msra.mxu0 %v581
      %723 = vmatprep.subr.mxu0 0.0
      %724 = vmatpush2.msra.mxu0 %v580
      %725 = vmatprep.subr.mxu0 0.0
      %726 = vmatpush2.msra.mxu0 %v579
      %727 = vmatprep.subr.mxu0 0.0
      %728 = vmatpush2.msra.mxu0 %v578
      %729 = vmatprep.subr.mxu0 0.0
      %730 = vmatpush2.msra.mxu0 %v577
      %731 = vmatprep.subr.mxu0 0.0
      %732 = vmatpush2.msra.mxu0 %v576
      %733 = vmatprep.subr.mxu0 0.0
      %734 = vmatpush2.msra.mxu0 %v575
      %735 = vmatprep.subr.mxu0 0.0
      %736 = vmatpush2.msra.mxu0 %v574
      %737 = vmatprep.subr.mxu0 0.0
      %738 = vmatpush2.msra.mxu0 %v573
      %739 = vmatprep.subr.mxu0 0.0
      %740 = vmatpush2.msra.mxu0 %v572
      %741 = vmatprep.subr.mxu0 0.0
      %742 = vmatpush2.msra.mxu0 %v571
      %743 = vmatprep.subr.mxu0 0.0
      %744 = vmatpush2.msra.mxu0 %v570
      %745 = vmatprep.subr.mxu0 0.0
      %746 = vmatpush2.msra.mxu0 %v569
      %747 = vmatprep.subr.mxu0 0.0
      %748 = vmatpush2.msra.mxu0 %v568
      %749 = vmatprep.subr.mxu0 0.0
      %750 = vmatpush2.msra.mxu0 %v567
      %751 = vmatprep.mubr.f32.mxu0 %v550
      %752 = vmatmul.mubr.f32.gmra.mxu0 %v549
      %v753 = vpop.f32.mrf.mxu0
      %v754 = vadd.f32 %v684, %v753
      %v755 = vpop.f32.mrf.mxu0
      %756 = vdwg.mxu0
      %v757 = vadd.f32 %v754, %v546
      %v758 = vld [vmem:[%s440] sm:$0xff]
      %v759 = vld [vmem:[%s440 + $0x8] sm:$0xff]
      %v760 = vld [vmem:[%s7] sm:$0xff]
      %v761 = vld [vmem:[%s7 + $0x8] sm:$0xff]
      %v762 = vld [vmem:[%s7 + $0x10] sm:$0xff]
      %v763 = vld [vmem:[%s7 + $0x18] sm:$0xff]
      %v764 = vld [vmem:[%s7 + $0x20] sm:$0xff]
      %v765 = vld [vmem:[%s7 + $0x28] sm:$0xff]
      %v766 = vld [vmem:[%s7 + $0x30] sm:$0xff]
      %v767 = vld [vmem:[%s7 + $0x38] sm:$0xff]
      %v768 = vld [vmem:[%s7 + $0x40] sm:$0xff]
      %v769 = vld [vmem:[%s7 + $0x48] sm:$0xff]
      %v770 = vld [vmem:[%s7 + $0x50] sm:$0xff]
      %v771 = vld [vmem:[%s7 + $0x58] sm:$0xff]
      %v772 = vld [vmem:[%s7 + $0x60] sm:$0xff]
      %v773 = vld [vmem:[%s7 + $0x68] sm:$0xff]
      %v774 = vld [vmem:[%s7 + $0x70] sm:$0xff]
      %v775 = vld [vmem:[%s7 + $0x78] sm:$0xff]
      %v776 = vld [vmem:[%s7 + $0x80] sm:$0xff]
      %v777 = vld [vmem:[%s7 + $0x88] sm:$0xff]
      %v778 = vld [vmem:[%s7 + $0x90] sm:$0xff]
      %v779 = vld [vmem:[%s7 + $0x98] sm:$0xff]
      %v780 = vld [vmem:[%s7 + $0xa0] sm:$0xff]
      %v781 = vld [vmem:[%s7 + $0xa8] sm:$0xff]
      %v782 = vld [vmem:[%s7 + $0xb0] sm:$0xff]
      %v783 = vld [vmem:[%s7 + $0xb8] sm:$0xff]
      %v784 = vld [vmem:[%s7 + $0xc0] sm:$0xff]
      %v785 = vld [vmem:[%s7 + $0xc8] sm:$0xff]
      %v786 = vld [vmem:[%s7 + $0xd0] sm:$0xff]
      %v787 = vld [vmem:[%s7 + $0xd8] sm:$0xff]
      %v788 = vld [vmem:[%s7 + $0xe0] sm:$0xff]
      %v789 = vld [vmem:[%s7 + $0xe8] sm:$0xff]
      %v790 = vld [vmem:[%s7 + $0xf0] sm:$0xff]
      %v791 = vld [vmem:[%s7 + $0xf8] sm:$0xff]
      %793 = vrot.lane.b32.xlu0 %v546, 96
      %v794 = vpop.permute.xlu0 %793
      %796 = vmatprep.subr.mxu0 0.0
      %797 = vmatpush1.msra.mxu0 %v775
      %798 = vmatprep.subr.mxu0 0.0
      %799 = vmatpush1.msra.mxu0 %v774
      %800 = vmatprep.subr.mxu0 0.0
      %801 = vmatpush1.msra.mxu0 %v773
      %802 = vmatprep.subr.mxu0 0.0
      %803 = vmatpush1.msra.mxu0 %v772
      %804 = vmatprep.subr.mxu0 0.0
      %805 = vmatpush1.msra.mxu0 %v771
      %806 = vmatprep.subr.mxu0 0.0
      %807 = vmatpush1.msra.mxu0 %v770
      %808 = vmatprep.subr.mxu0 0.0
      %809 = vmatpush1.msra.mxu0 %v769
      %810 = vmatprep.subr.mxu0 0.0
      %811 = vmatpush1.msra.mxu0 %v768
      %812 = vmatprep.subr.mxu0 0.0
      %813 = vmatpush1.msra.mxu0 %v767
      %814 = vmatprep.subr.mxu0 0.0
      %815 = vmatpush1.msra.mxu0 %v766
      %816 = vmatprep.subr.mxu0 0.0
      %817 = vmatpush1.msra.mxu0 %v765
      %818 = vmatprep.subr.mxu0 0.0
      %819 = vmatpush1.msra.mxu0 %v764
      %820 = vmatprep.subr.mxu0 0.0
      %821 = vmatpush1.msra.mxu0 %v763
      %822 = vmatprep.subr.mxu0 0.0
      %823 = vmatpush1.msra.mxu0 %v762
      %824 = vmatprep.subr.mxu0 0.0
      %825 = vmatpush1.msra.mxu0 %v761
      %826 = vmatprep.subr.mxu0 0.0
      %827 = vmatpush1.msra.mxu0 %v760
      %828 = vmatprep.subr.mxu0 0.0
      %829 = vmatpush2.msra.mxu0 %v791
      %830 = vmatprep.subr.mxu0 0.0
      %831 = vmatpush2.msra.mxu0 %v790
      %832 = vmatprep.subr.mxu0 0.0
      %833 = vmatpush2.msra.mxu0 %v789
      %834 = vmatprep.subr.mxu0 0.0
      %835 = vmatpush2.msra.mxu0 %v788
      %836 = vmatprep.subr.mxu0 0.0
      %837 = vmatpush2.msra.mxu0 %v787
      %838 = vmatprep.subr.mxu0 0.0
      %839 = vmatpush2.msra.mxu0 %v786
      %840 = vmatprep.subr.mxu0 0.0
      %841 = vmatpush2.msra.mxu0 %v785
      %842 = vmatprep.subr.mxu0 0.0
      %843 = vmatpush2.msra.mxu0 %v784
      %844 = vmatprep.subr.mxu0 0.0
      %845 = vmatpush2.msra.mxu0 %v783
      %846 = vmatprep.subr.mxu0 0.0
      %847 = vmatpush2.msra.mxu0 %v782
      %848 = vmatprep.subr.mxu0 0.0
      %849 = vmatpush2.msra.mxu0 %v781
      %850 = vmatprep.subr.mxu0 0.0
      %851 = vmatpush2.msra.mxu0 %v780
      %852 = vmatprep.subr.mxu0 0.0
      %853 = vmatpush2.msra.mxu0 %v779
      %854 = vmatprep.subr.mxu0 0.0
      %855 = vmatpush2.msra.mxu0 %v778
      %856 = vmatprep.subr.mxu0 0.0
      %857 = vmatpush2.msra.mxu0 %v777
      %858 = vmatprep.subr.mxu0 0.0
      %859 = vmatpush2.msra.mxu0 %v776
      %860 = vmatprep.mubr.f32.mxu0 %v759
      %861 = vmatmul.mubr.f32.gmra.mxu0 %v758
      %v862 = vpop.f32.mrf.mxu0
      %v863 = vadd.f32 %v794, %v862
      %v864 = vpop.f32.mrf.mxu0
      %865 = vdwg.mxu0
      %v866 = vmax.f32 %v863, 0.0
      %v867 = vmax.f32 %v757, 0.0
      %v868 = vld [vmem:[%s8] sm:$0xff]
      %v869 = vld [vmem:[%s8 + $0x8] sm:$0xff]
      %v870 = vld [vmem:[%s8 + $0x10] sm:$0xff]
      %v871 = vld [vmem:[%s8 + $0x18] sm:$0xff]
      %vm872 = vcmask 261120
      %v874 = vsel %vm872, %v866, 0
      %v877 = vsel %vm872, %v867, 0
      %879 = vmatprep.subr.mxu0 0.0
      %880 = vmatpush1.msra.mxu0 0.0
      %881 = vmatprep.subr.mxu0 0.0
      %882 = vmatpush1.msra.mxu0 0.0
      %883 = vmatprep.subr.mxu0 0.0
      %884 = vmatpush1.msra.mxu0 0.0
      %885 = vmatprep.subr.mxu0 0.0
      %886 = vmatpush1.msra.mxu0 0.0
      %887 = vmatprep.subr.mxu0 0.0
      %888 = vmatpush1.msra.mxu0 0.0
      %889 = vmatprep.subr.mxu0 0.0
      %890 = vmatpush1.msra.mxu0 0.0
      %891 = vmatprep.subr.mxu0 0.0
      %892 = vmatpush1.msra.mxu0 0.0
      %893 = vmatprep.subr.mxu0 0.0
      %894 = vmatpush1.msra.mxu0 0.0
      %895 = vmatprep.subr.mxu0 0.0
      %896 = vmatpush1.msra.mxu0 0.0
      %897 = vmatprep.subr.mxu0 0.0
      %898 = vmatpush1.msra.mxu0 0.0
      %899 = vmatprep.subr.mxu0 0.0
      %900 = vmatpush1.msra.mxu0 0.0
      %901 = vmatprep.subr.mxu0 0.0
      %902 = vmatpush1.msra.mxu0 0.0
      %903 = vmatprep.subr.mxu0 0.0
      %904 = vmatpush1.msra.mxu0 %v871
      %905 = vmatprep.subr.mxu0 0.0
      %906 = vmatpush1.msra.mxu0 %v870
      %907 = vmatprep.subr.mxu0 0.0
      %908 = vmatpush1.msra.mxu0 %v869
      %909 = vmatprep.subr.mxu0 0.0
      %910 = vmatpush1.msra.mxu0 %v868
      %911 = vmatprep.subr.mxu0 0.0
      %912 = vmatpush2.msra.mxu0 0.0
      %913 = vmatprep.subr.mxu0 0.0
      %914 = vmatpush2.msra.mxu0 0.0
      %915 = vmatprep.subr.mxu0 0.0
      %916 = vmatpush2.msra.mxu0 0.0
      %917 = vmatprep.subr.mxu0 0.0
      %918 = vmatpush2.msra.mxu0 0.0
      %919 = vmatprep.subr.mxu0 0.0
      %920 = vmatpush2.msra.mxu0 0.0
      %921 = vmatprep.subr.mxu0 0.0
      %922 = vmatpush2.msra.mxu0 0.0
      %923 = vmatprep.subr.mxu0 0.0
      %924 = vmatpush2.msra.mxu0 0.0
      %925 = vmatprep.subr.mxu0 0.0
      %926 = vmatpush2.msra.mxu0 0.0
      %927 = vmatprep.subr.mxu0 0.0
      %928 = vmatpush2.msra.mxu0 0.0
      %929 = vmatprep.subr.mxu0 0.0
      %930 = vmatpush2.msra.mxu0 0.0
      %931 = vmatprep.subr.mxu0 0.0
      %932 = vmatpush2.msra.mxu0 0.0
      %933 = vmatprep.subr.mxu0 0.0
      %934 = vmatpush2.msra.mxu0 0.0
      %935 = vmatprep.subr.mxu0 0.0
      %936 = vmatpush2.msra.mxu0 0.0
      %937 = vmatprep.subr.mxu0 0.0
      %938 = vmatpush2.msra.mxu0 0.0
      %939 = vmatprep.subr.mxu0 0.0
      %940 = vmatpush2.msra.mxu0 0.0
      %941 = vmatprep.subr.mxu0 0.0
      %942 = vmatpush2.msra.mxu0 0.0
      %943 = vmatprep.mubr.f32.mxu0 0.0
      %944 = vmatmul.mubr.f32.gmra.mxu0 %v874
      %v945 = vpop.f32.mrf.mxu0
      %v946 = vadd.f32 0.0, %v945
      %v947 = vpop.f32.mrf.mxu0
      %948 = vmatprep.mubr.f32.mxu0 0.0
      %949 = vmatmul.mubr.f32.gmra.mxu0 %v877
      %v950 = vpop.f32.mrf.mxu0
      %v951 = vadd.f32 0.0, %v950
      %v952 = vpop.f32.mrf.mxu0
      %953 = vdwg.mxu0
      %v954 = vmax.f32 %v946, 0.0
      %v955 = vmax.f32 %v951, 0.0
      %v956 = vld [vmem:[%s9] sm:$0xff]
      %v957 = vld [vmem:[%s9 + $0x8] sm:$0xff]
      %v958 = vld [vmem:[%s9 + $0x10] sm:$0xff]
      %v959 = vld [vmem:[%s9 + $0x18] sm:$0xff]
      %v960 = vld [vmem:[%s9 + $0x20] sm:$0xff]
      %v961 = vld [vmem:[%s9 + $0x28] sm:$0xff]
      %v962 = vld [vmem:[%s9 + $0x30] sm:$0xff]
      %v963 = vld [vmem:[%s9 + $0x38] sm:$0xff]
      %vm964 = vcmask 523264
      %v966 = vsel %vm964, %v954, 0
      %v969 = vsel %vm964, %v955, 0
      %971 = vmatprep.subr.mxu0 0.0
      %972 = vmatpush1.msra.mxu0 0.0
      %973 = vmatprep.subr.mxu0 0.0
      %974 = vmatpush1.msra.mxu0 0.0
      %975 = vmatprep.subr.mxu0 0.0
      %976 = vmatpush1.msra.mxu0 0.0
      %977 = vmatprep.subr.mxu0 0.0
      %978 = vmatpush1.msra.mxu0 0.0
      %979 = vmatprep.subr.mxu0 0.0
      %980 = vmatpush1.msra.mxu0 0.0
      %981 = vmatprep.subr.mxu0 0.0
      %982 = vmatpush1.msra.mxu0 0.0
      %983 = vmatprep.subr.mxu0 0.0
      %984 = vmatpush1.msra.mxu0 0.0
      %985 = vmatprep.subr.mxu0 0.0
      %986 = vmatpush1.msra.mxu0 0.0
      %987 = vmatprep.subr.mxu0 0.0
      %988 = vmatpush1.msra.mxu0 %v963
      %989 = vmatprep.subr.mxu0 0.0
      %990 = vmatpush1.msra.mxu0 %v962
      %991 = vmatprep.subr.mxu0 0.0
      %992 = vmatpush1.msra.mxu0 %v961
      %993 = vmatprep.subr.mxu0 0.0
      %994 = vmatpush1.msra.mxu0 %v960
      %995 = vmatprep.subr.mxu0 0.0
      %996 = vmatpush1.msra.mxu0 %v959
      %997 = vmatprep.subr.mxu0 0.0
      %998 = vmatpush1.msra.mxu0 %v958
      %999 = vmatprep.subr.mxu0 0.0
      %1000 = vmatpush1.msra.mxu0 %v957
      %1001 = vmatprep.subr.mxu0 0.0
      %1002 = vmatpush1.msra.mxu0 %v956
      %1003 = vmatprep.subr.mxu0 0.0
      %1004 = vmatpush2.msra.mxu0 0.0
      %1005 = vmatprep.subr.mxu0 0.0
      %1006 = vmatpush2.msra.mxu0 0.0
      %1007 = vmatprep.subr.mxu0 0.0
      %1008 = vmatpush2.msra.mxu0 0.0
      %1009 = vmatprep.subr.mxu0 0.0
      %1010 = vmatpush2.msra.mxu0 0.0
      %1011 = vmatprep.subr.mxu0 0.0
      %1012 = vmatpush2.msra.mxu0 0.0
      %1013 = vmatprep.subr.mxu0 0.0
      %1014 = vmatpush2.msra.mxu0 0.0
      %1015 = vmatprep.subr.mxu0 0.0
      %1016 = vmatpush2.msra.mxu0 0.0
      %1017 = vmatprep.subr.mxu0 0.0
      %1018 = vmatpush2.msra.mxu0 0.0
      %1019 = vmatprep.subr.mxu0 0.0
      %1020 = vmatpush2.msra.mxu0 0.0
      %1021 = vmatprep.subr.mxu0 0.0
      %1022 = vmatpush2.msra.mxu0 0.0
      %1023 = vmatprep.subr.mxu0 0.0
      %1024 = vmatpush2.msra.mxu0 0.0
      %1025 = vmatprep.subr.mxu0 0.0
      %1026 = vmatpush2.msra.mxu0 0.0
      %1027 = vmatprep.subr.mxu0 0.0
      %1028 = vmatpush2.msra.mxu0 0.0
      %1029 = vmatprep.subr.mxu0 0.0
      %1030 = vmatpush2.msra.mxu0 0.0
      %1031 = vmatprep.subr.mxu0 0.0
      %1032 = vmatpush2.msra.mxu0 0.0
      %1033 = vmatprep.subr.mxu0 0.0
      %1034 = vmatpush2.msra.mxu0 0.0
      %1035 = vmatprep.mubr.f32.mxu0 0.0
      %1036 = vmatmul.mubr.f32.gmra.mxu0 %v966
      %v1037 = vpop.f32.mrf.mxu0
      %v1038 = vadd.f32 0.0, %v1037
      %v1039 = vpop.f32.mrf.mxu0
      %1040 = vmatprep.mubr.f32.mxu0 0.0
      %1041 = vmatmul.mubr.f32.gmra.mxu0 %v969
      %v1042 = vpop.f32.mrf.mxu0
      %v1043 = vadd.f32 0.0, %v1042
      %v1044 = vpop.f32.mrf.mxu0
      %1045 = vdwg.mxu0
      %v1046 = vmax.f32 %v1038, 0.0
      %v1047 = vmax.f32 %v1043, 0.0
      %v1048 = vld [vmem:[%s10] sm:$0xff]
      %v1049 = vld [vmem:[%s10 + $0x8] sm:$0xff]
      %v1050 = vld [vmem:[%s10 + $0x10] sm:$0xff]
      %v1051 = vld [vmem:[%s10 + $0x18] sm:$0xff]
      %v1052 = vld [vmem:[%s10 + $0x20] sm:$0xff]
      %v1053 = vld [vmem:[%s10 + $0x28] sm:$0xff]
      %v1054 = vld [vmem:[%s10 + $0x30] sm:$0xff]
      %v1055 = vld [vmem:[%s10 + $0x38] sm:$0xff]
      %v1056 = vld [vmem:[%s10 + $0x40] sm:$0xff]
      %v1057 = vld [vmem:[%s10 + $0x48] sm:$0xff]
      %v1058 = vld [vmem:[%s10 + $0x50] sm:$0xff]
      %v1059 = vld [vmem:[%s10 + $0x58] sm:$0xff]
      %v1060 = vld [vmem:[%s10 + $0x60] sm:$0xff]
      %v1061 = vld [vmem:[%s10 + $0x68] sm:$0xff]
      %v1062 = vld [vmem:[%s10 + $0x70] sm:$0xff]
      %v1063 = vld [vmem:[%s10 + $0x78] sm:$0xff]
      %1064 = vmatprep.subr.mxu0 0.0
      %1065 = vmatpush1.msra.mxu0 %v1063
      %1066 = vmatprep.subr.mxu0 0.0
      %1067 = vmatpush1.msra.mxu0 %v1062
      %1068 = vmatprep.subr.mxu0 0.0
      %1069 = vmatpush1.msra.mxu0 %v1061
      %1070 = vmatprep.subr.mxu0 0.0
      %1071 = vmatpush1.msra.mxu0 %v1060
      %1072 = vmatprep.subr.mxu0 0.0
      %1073 = vmatpush1.msra.mxu0 %v1059
      %1074 = vmatprep.subr.mxu0 0.0
      %1075 = vmatpush1.msra.mxu0 %v1058
      %1076 = vmatprep.subr.mxu0 0.0
      %1077 = vmatpush1.msra.mxu0 %v1057
      %1078 = vmatprep.subr.mxu0 0.0
      %1079 = vmatpush1.msra.mxu0 %v1056
      %1080 = vmatprep.subr.mxu0 0.0
      %1081 = vmatpush1.msra.mxu0 %v1055
      %1082 = vmatprep.subr.mxu0 0.0
      %1083 = vmatpush1.msra.mxu0 %v1054
      %1084 = vmatprep.subr.mxu0 0.0
      %1085 = vmatpush1.msra.mxu0 %v1053
      %1086 = vmatprep.subr.mxu0 0.0
      %1087 = vmatpush1.msra.mxu0 %v1052
      %1088 = vmatprep.subr.mxu0 0.0
      %1089 = vmatpush1.msra.mxu0 %v1051
      %1090 = vmatprep.subr.mxu0 0.0
      %1091 = vmatpush1.msra.mxu0 %v1050
      %1092 = vmatprep.subr.mxu0 0.0
      %1093 = vmatpush1.msra.mxu0 %v1049
      %1094 = vmatprep.subr.mxu0 0.0
      %1095 = vmatpush1.msra.mxu0 %v1048
      %1096 = vmatprep.subr.mxu0 0.0
      %1097 = vmatpush2.msra.mxu0 0.0
      %1098 = vmatprep.subr.mxu0 0.0
      %1099 = vmatpush2.msra.mxu0 0.0
      %1100 = vmatprep.subr.mxu0 0.0
      %1101 = vmatpush2.msra.mxu0 0.0
      %1102 = vmatprep.subr.mxu0 0.0
      %1103 = vmatpush2.msra.mxu0 0.0
      %1104 = vmatprep.subr.mxu0 0.0
      %1105 = vmatpush2.msra.mxu0 0.0
      %1106 = vmatprep.subr.mxu0 0.0
      %1107 = vmatpush2.msra.mxu0 0.0
      %1108 = vmatprep.subr.mxu0 0.0
      %1109 = vmatpush2.msra.mxu0 0.0
      %1110 = vmatprep.subr.mxu0 0.0
      %1111 = vmatpush2.msra.mxu0 0.0
      %1112 = vmatprep.subr.mxu0 0.0
      %1113 = vmatpush2.msra.mxu0 0.0
      %1114 = vmatprep.subr.mxu0 0.0
      %1115 = vmatpush2.msra.mxu0 0.0
      %1116 = vmatprep.subr.mxu0 0.0
      %1117 = vmatpush2.msra.mxu0 0.0
      %1118 = vmatprep.subr.mxu0 0.0
      %1119 = vmatpush2.msra.mxu0 0.0
      %1120 = vmatprep.subr.mxu0 0.0
      %1121 = vmatpush2.msra.mxu0 0.0
      %1122 = vmatprep.subr.mxu0 0.0
      %1123 = vmatpush2.msra.mxu0 0.0
      %1124 = vmatprep.subr.mxu0 0.0
      %1125 = vmatpush2.msra.mxu0 0.0
      %1126 = vmatprep.subr.mxu0 0.0
      %1127 = vmatpush2.msra.mxu0 0.0
      %1128 = vmatprep.mubr.f32.mxu0 0.0
      %1129 = vmatmul.mubr.f32.gmra.mxu0 %v1046
      %v1130 = vpop.f32.mrf.mxu0
      %v1131 = vadd.f32 0.0, %v1130
      %v1132 = vpop.f32.mrf.mxu0
      %1133 = vmatprep.mubr.f32.mxu0 0.0
      %1134 = vmatmul.mubr.f32.gmra.mxu0 %v1047
      %v1135 = vpop.f32.mrf.mxu0
      %v1136 = vadd.f32 0.0, %v1135
      %v1137 = vpop.f32.mrf.mxu0
      %1138 = vdwg.mxu0
      %v1139 = vmax.f32 %v1131, 0.0
      %v1140 = vmax.f32 %v1136, 0.0
      %v1141 = vsub.f32 %v1139, %v1140
      %vm1142 = vcmask 64512
      %1143 = vst.msk [vmem:[%s444] sm:$0xff] %vm1142, %v1141
      %p1144 = scmp.lt.s32.totalorder %s22, 1
      %s1145 = scalar_select %p1144, %s22, 1
      %s1146 = smul.addr %s1145, 8
      %s1147 = scalar_lea.vmem %s11, %s1146
      // Predicated region
      $region65: #{tpu_custom_call.1} parent=63 // pred_check
        %p1148 = pneg %p291
      $region66: #{tpu_custom_call.1} parent=63 // pred_check_branch
        %1150 = sbr.rel (%p1148) target = $region68
      $region67: #{tpu_custom_call.1} parent=63 // pred_region
        _
      $region68: #{tpu_custom_call.1} parent=63 // pred_fallthru
        _
    $region64: #{tpu_custom_call.1} parent=5 // pred_fallthru
      _
    %p1151 = scmp.le.s32.totalorder 2, %s17
    // Predicated region
    $region69: #{tpu_custom_call.1} parent=5 // pred_check
      %p1152 = pneg %p1151
    $region70: #{tpu_custom_call.1} parent=5 // pred_check_branch
      %1154 = sbr.rel (%p1152) target = $region72
    $region71: #{tpu_custom_call.1} parent=5 // pred_region
      %s1155 = ssub.s32 %s17, 2
      // Predicated region
      $region73: #{tpu_custom_call.1} parent=71 // pred_check
        %p1156 = pneg %p297
      $region74: #{tpu_custom_call.1} parent=71 // pred_check_branch
        %1158 = sbr.rel (%p1156) target = $region76
      $region75: #{tpu_custom_call.1} parent=71 // pred_region
        %p1159 = scmp.lt.s32.totalorder %s23, 1
        %s1160 = scalar_select %p1159, %s23, 1
        %s1161 = smul.addr %s1160, 8
        %s1162 = scalar_lea.vmem %s11, %s1161
      $region76: #{tpu_custom_call.1} parent=71 // pred_fallthru
        _
    $region72: #{tpu_custom_call.1} parent=5 // pred_fallthru
      _
  $region6: #{tpu_custom_call.1} parent=0 // loop_footer
    %s21 = sadd.s32 1, %s17
  $region7: #{tpu_custom_call.1} parent=0 // loop_footer_branch
    %16 = sbr.rel target = $region3
  $region8: #{tpu_custom_call.1} parent=0 // loop_exit
    _

</llo_original>
